<compile_context>
chip_gen: v6e
topology: v6e:2x2x1
jax: 0.10.0
libtpu: 0.0.40
codegen_flags: <defaults>
</compile_context>

<pallas_src>
import jax
import jax.numpy as jnp
from jax.experimental import pallas as pl
from jax.experimental.pallas import tpu as pltpu

_SUBLANE = 8


def _round_up(n, m):
    return ((n + m - 1) // m) * m


def _linear_sigmoid_kernel(x_ref, w_ref, b_ref, o_ref):
    # x_ref: [TB, d]   batch tile
    # w_ref: [d, q]    VMEM-resident across the batch grid
    # b_ref: [1, q]    VMEM-resident bias
    # o_ref: [TB, q]
    y = jnp.dot(x_ref[...], w_ref[...], preferred_element_type=jnp.float32)
    o_ref[...] = jax.nn.sigmoid(y + b_ref[...]).astype(o_ref.dtype)


def net_forward(x, w, b, *, max_batch_tile=2048):
    """Pallas equivalent of Net.forward.  Returns (out, out).

    x: [B, d] float32
    w: [d, q] float32 (already transposed vs. PyTorch's [q, d] layout)
    b: [q]    float32
    """
    B, d = x.shape
    d2, q = w.shape
    assert d == d2 and b.shape == (q,)

    x = x.astype(jnp.float32)
    w = w.astype(jnp.float32)
    b2d = b.astype(jnp.float32).reshape(1, q)

    # ---- batch tiling: balanced tiles, sublane-aligned --------------------
    if B <= max_batch_tile:
        num_tiles = 1
        tb = _round_up(B, _SUBLANE)
    else:
        num_tiles = pl.cdiv(B, max_batch_tile)
        tb = _round_up(pl.cdiv(B, num_tiles), _SUBLANE)
    b_pad = num_tiles * tb

    if b_pad != B:
        x = jnp.pad(x, ((0, b_pad - B), (0, 0)))

    cost = pl.CostEstimate(
        flops=2 * B * d * q,
        transcendentals=B * q,
        bytes_accessed=4 * (B * d + d * q + q + B * q),
    )

    out_padded = pl.pallas_call(
        _linear_sigmoid_kernel,
        out_shape=jax.ShapeDtypeStruct((b_pad, q), jnp.float32),
        grid=(num_tiles,),
        in_specs=[
            pl.BlockSpec((tb, d), lambda i: (i, 0)),    # batch-tiled x
            pl.BlockSpec((d, q), lambda i: (0, 0)),     # resident weight
            pl.BlockSpec((1, q), lambda i: (0, 0)),     # resident bias
        ],
        out_specs=pl.BlockSpec((tb, q), lambda i: (i, 0)),
        compiler_params=pltpu.CompilerParams(
            dimension_semantics=("parallel",)),          # v7x: 2 TCs
        cost_estimate=cost,
    )(x, w, b2d)

    out = out_padded[:B] if b_pad != B else out_padded
    # The PyTorch module returns the same tensor twice.
    return (out, out)


def _reference(x, w, b):
    return jax.nn.sigmoid(x @ w + b.reshape(1, -1))


if __name__ == "__main__":
    d = 50   # matches the script-level `d = 50`
    q = 4    # number of output classes (BCE multi-label head)
    B = 8    # small batch

    key = jax.random.PRNGKey(0)
    kx, kw, kb = jax.random.split(key, 3)

    x = jax.random.normal(kx, (B, d), dtype=jnp.float32)
    # Deterministic PyTorch-like init: uniform(-1/sqrt(d), 1/sqrt(d))
    bound = 1.0 / jnp.sqrt(jnp.float32(d))
    w = jax.random.uniform(kw, (d, q), dtype=jnp.float32,
                           minval=-bound, maxval=bound)
    b = jax.random.uniform(kb, (q,), dtype=jnp.float32,
                           minval=-bound, maxval=bound)

    net_forward_jit = jax.jit(net_forward)

    out1, out2 = net_forward_jit(x, w, b)
    out1 = jax.block_until_ready(out1)
    out2 = jax.block_until_ready(out2)

    ref = _reference(x, w, b)
    assert out1.shape == (B, q) and out2.shape == (B, q)
    assert jnp.allclose(out1, ref, atol=1e-5, rtol=1e-5)
    assert jnp.allclose(out2, ref, atol=1e-5, rtol=1e-5)

    print("KERNEL_OK")
</pallas_src>

<mosaic_0001>
module attributes {stable_mosaic.version = 11 : i64} {
  func.func @_linear_sigmoid_kernel(%arg0: i32, %arg1: memref<8x50xf32, #tpu.memory_space<vmem>>, %arg2: memref<50x4xf32, #tpu.memory_space<vmem>>, %arg3: memref<1x4xf32, #tpu.memory_space<vmem>>, %arg4: memref<8x4xf32, #tpu.memory_space<vmem>>) attributes {dimension_semantics = [#tpu.dimension_semantics<parallel>], iteration_bounds = array<i64: 1>, scalar_prefetch = 0 : i64, scratch_operands = 0 : i64, tpu.core_type = #tpu.core_type<tc>, window_params = [{transform_indices = @transform_0, window_bounds = array<i64: 8, 50>}, {pipeline_mode = #tpu.pipeline_mode<synchronous>, transform_indices = @transform_1, window_bounds = array<i64: 50, 4>}, {pipeline_mode = #tpu.pipeline_mode<synchronous>, transform_indices = @transform_2, window_bounds = array<i64: 1, 4>}, {transform_indices = @transform_3, window_bounds = array<i64: 8, 4>}]} {
    %c0 = arith.constant 0 : index
    %c0_0 = arith.constant 0 : index
    %0 = vector.load %arg1[%c0, %c0_0] : memref<8x50xf32, #tpu.memory_space<vmem>>, vector<8x50xf32>
    %c0_1 = arith.constant 0 : index
    %c0_2 = arith.constant 0 : index
    %1 = vector.load %arg2[%c0_1, %c0_2] : memref<50x4xf32, #tpu.memory_space<vmem>>, vector<50x4xf32>
    %cst = arith.constant dense<0.000000e+00> : vector<8x4xf32>
    %2 = tpu.matmul %0, %1, %cst {dimension_numbers = #tpu.dot_dimension_numbers<[1], [0], [0], [1], [0, 0, 1, 1], [], []>} : vector<8x50xf32>, vector<50x4xf32>, vector<8x4xf32> -> vector<8x4xf32>
    %c0_3 = arith.constant 0 : index
    %c0_4 = arith.constant 0 : index
    %3 = vector.load %arg3[%c0_3, %c0_4] : memref<1x4xf32, #tpu.memory_space<vmem>>, vector<1x4xf32>
    %4 = vector.broadcast %3 : vector<1x4xf32> to vector<8x4xf32>
    %5 = arith.addf %2, %4 : vector<8x4xf32>
    %6 = arith.negf %5 : vector<8x4xf32>
    %7 = math.exp %6 : vector<8x4xf32>
    %cst_5 = arith.constant 1.000000e+00 : f32
    %8 = vector.broadcast %cst_5 : f32 to vector<8x4xf32>
    %9 = arith.addf %8, %7 : vector<8x4xf32>
    %10 = arith.divf %8, %9 : vector<8x4xf32>
    %c0_6 = arith.constant 0 : index
    %c0_7 = arith.constant 0 : index
    %11 = vector.load %arg4[%c0_6, %c0_7] : memref<8x4xf32, #tpu.memory_space<vmem>>, vector<8x4xf32>
    tpu.vector_store %arg4[%c0_6, %c0_7], %10 {strides = array<i32>} : memref<8x4xf32, #tpu.memory_space<vmem>>, vector<8x4xf32>,
    return
  }
  func.func @transform_0(%arg0: i32) -> (i32, i32) {
    %c0_i32 = arith.constant 0 : i32
    %c0_i32_0 = arith.constant 0 : i32
    return %arg0, %c0_i32 : i32, i32
  }
  func.func @transform_1(%arg0: i32) -> (i32, i32) {
    %c0_i32 = arith.constant 0 : i32
    %c0_i32_0 = arith.constant 0 : i32
    %c0_i32_1 = arith.constant 0 : i32
    return %c0_i32, %c0_i32_0 : i32, i32
  }
  func.func @transform_2(%arg0: i32) -> (i32, i32) {
    %c0_i32 = arith.constant 0 : i32
    %c0_i32_0 = arith.constant 0 : i32
    %c0_i32_1 = arith.constant 0 : i32
    return %c0_i32, %c0_i32_0 : i32, i32
  }
  func.func @transform_3(%arg0: i32) -> (i32, i32) {
    %c0_i32 = arith.constant 0 : i32
    %c0_i32_0 = arith.constant 0 : i32
    return %arg0, %c0_i32 : i32, i32
  }
}

</mosaic_0001>

<llo_original>
// kernel: net_forward.1
$region0: #{net_forward.1}
  #allocation0 [shape = 'u32[]', space=smem, size = 0x4, offset = 0x4, fixed_abs, tag = 'smem constant byte address 0x4 - core index']
  #allocation1 [shape = 'u32[144,128]{1,0:T(1,128)}', space=vmem, size = 0x12000, scoped, tag = 'internal scratch']
  %s0 = inlined_call_operand.vmem [shape: f32[8,50], index: 0, kind: input, shape index: {}]
  %s1 = inlined_call_operand.vmem [shape: f32[50,4], index: 1, kind: input, shape index: {}]
  %s2 = inlined_call_operand.vmem [shape: f32[1,4], index: 2, kind: input, shape index: {}]
  %s3 = inlined_call_operand.vmem [shape: f32[8,4], index: 3, kind: output, shape index: {}]
  %s4 = sld [smem:[#allocation0]]
  $region22: #{net_forward.1} parent=0
    _
  %s6 = ssub.s32 1, %s4
  %s7 = scalar_select 0, %s6, %s4
  // Predicated region
  $region2: #{net_forward.1} parent=0 // pred_check
    _
  $region3: #{net_forward.1} parent=0 // pred_check_branch
    %9 = sbr.rel (0) target = $region5
  $region4: #{net_forward.1} parent=0 // pred_region
    _
  $region5: #{net_forward.1} parent=0 // pred_fallthru
    _
  // Predicated region
  $region6: #{net_forward.1} parent=0 // pred_check
    _
  $region7: #{net_forward.1} parent=0 // pred_check_branch
    %11 = sbr.rel (0) target = $region9
  $region8: #{net_forward.1} parent=0 // pred_region
    _
  $region9: #{net_forward.1} parent=0 // pred_fallthru
    _
  // Predicated region
  $region10: #{net_forward.1} parent=0 // pred_check
    _
  $region11: #{net_forward.1} parent=0 // pred_check_branch
    %13 = sbr.rel (0) target = $region13
  $region12: #{net_forward.1} parent=0 // pred_region
    _
  $region13: #{net_forward.1} parent=0 // pred_fallthru
    _
  %v14 = vld [vmem:[%s0] sm:$0xff]
  %v15 = vld [vmem:[%s1] sm:$0xff]
  %v16 = vld [vmem:[%s1 + $0x8] sm:$0xff]
  %v17 = vld [vmem:[%s1 + $0x10] sm:$0xff]
  %v18 = vld [vmem:[%s1 + $0x18] sm:$0xff]
  %v19 = vld [vmem:[%s1 + $0x20] sm:$0xff]
  %v20 = vld [vmem:[%s1 + $0x28] sm:$0xff]
  %v21 = vld [vmem:[%s1 + $0x30] sm:$0x3]
  %v22 = vld [vmem:[%s2] sm:$0x1]
  %v24 = vlaneseq
  %v25 = vshrl.u32 %v24, 7
  %v26 = vsub.s32 0, %v25
  %v27 = vrot.slane %v22, %v26
  %vm29 = vcmask 408576
  %v31 = vsel %vm29, %v14, 0
  %vm33 = vcmask 1041408
  %v35 = vsel %vm33, %v21, 0
  %37 = vmatprep.subr.mxu0 0.0
  %38 = vmatpush1.msra.mxu0 0.0
  %39 = vmatprep.subr.mxu0 0.0
  %40 = vmatpush1.msra.mxu0 0.0
  %41 = vmatprep.subr.mxu0 0.0
  %42 = vmatpush1.msra.mxu0 0.0
  %43 = vmatprep.subr.mxu0 0.0
  %44 = vmatpush1.msra.mxu0 0.0
  %45 = vmatprep.subr.mxu0 0.0
  %46 = vmatpush1.msra.mxu0 0.0
  %47 = vmatprep.subr.mxu0 0.0
  %48 = vmatpush1.msra.mxu0 0.0
  %49 = vmatprep.subr.mxu0 0.0
  %50 = vmatpush1.msra.mxu0 0.0
  %51 = vmatprep.subr.mxu0 0.0
  %52 = vmatpush1.msra.mxu0 0.0
  %53 = vmatprep.subr.mxu0 0.0
  %54 = vmatpush1.msra.mxu0 0.0
  %55 = vmatprep.subr.mxu0 0.0
  %56 = vmatpush1.msra.mxu0 %v35
  %57 = vmatprep.subr.mxu0 0.0
  %58 = vmatpush1.msra.mxu0 %v20
  %59 = vmatprep.subr.mxu0 0.0
  %60 = vmatpush1.msra.mxu0 %v19
  %61 = vmatprep.subr.mxu0 0.0
  %62 = vmatpush1.msra.mxu0 %v18
  %63 = vmatprep.subr.mxu0 0.0
  %64 = vmatpush1.msra.mxu0 %v17
  %65 = vmatprep.subr.mxu0 0.0
  %66 = vmatpush1.msra.mxu0 %v16
  %67 = vmatprep.subr.mxu0 0.0
  %68 = vmatpush1.msra.mxu0 %v15
  %69 = vmatprep.subr.mxu0 0.0
  %70 = vmatpush2.msra.mxu0 0.0
  %71 = vmatprep.subr.mxu0 0.0
  %72 = vmatpush2.msra.mxu0 0.0
  %73 = vmatprep.subr.mxu0 0.0
  %74 = vmatpush2.msra.mxu0 0.0
  %75 = vmatprep.subr.mxu0 0.0
  %76 = vmatpush2.msra.mxu0 0.0
  %77 = vmatprep.subr.mxu0 0.0
  %78 = vmatpush2.msra.mxu0 0.0
  %79 = vmatprep.subr.mxu0 0.0
  %80 = vmatpush2.msra.mxu0 0.0
  %81 = vmatprep.subr.mxu0 0.0
  %82 = vmatpush2.msra.mxu0 0.0
  %83 = vmatprep.subr.mxu0 0.0
  %84 = vmatpush2.msra.mxu0 0.0
  %85 = vmatprep.subr.mxu0 0.0
  %86 = vmatpush2.msra.mxu0 0.0
  %87 = vmatprep.subr.mxu0 0.0
  %88 = vmatpush2.msra.mxu0 0.0
  %89 = vmatprep.subr.mxu0 0.0
  %90 = vmatpush2.msra.mxu0 0.0
  %91 = vmatprep.subr.mxu0 0.0
  %92 = vmatpush2.msra.mxu0 0.0
  %93 = vmatprep.subr.mxu0 0.0
  %94 = vmatpush2.msra.mxu0 0.0
  %95 = vmatprep.subr.mxu0 0.0
  %96 = vmatpush2.msra.mxu0 0.0
  %97 = vmatprep.subr.mxu0 0.0
  %98 = vmatpush2.msra.mxu0 0.0
  %99 = vmatprep.subr.mxu0 0.0
  %100 = vmatpush2.msra.mxu0 0.0
  %101 = vmatprep.mubr.f32.mxu0 0.0
  %102 = vmatmul.mubr.f32.gmra.mxu0 %v31
  %v103 = vpop.f32.mrf.mxu0
  %v104 = vadd.f32 %v27, %v103
  %v105 = vpop.f32.mrf.mxu0
  %106 = vdwg.mxu0
  %v107 = vxor.u32 %v104, 2147483648
  %v108 = vmul.f32 %v107, 1.442695
  %v109 = vpow.pop %v108
  %v110 = vadd.f32 %v109, 1.0
  %v111 = vrcp.pop %v110
  %v112 = vmul.f32 1.0, %v111
  %vm113 = vcmask 31744
  %114 = vst.msk [vmem:[%s3] sm:$0xff] %vm113, %v112
  // Predicated region
  $region14: #{net_forward.1} parent=0 // pred_check
    _
  $region15: #{net_forward.1} parent=0 // pred_check_branch
    %116 = sbr.rel (0) target = $region17
  $region16: #{net_forward.1} parent=0 // pred_region
    _
  $region17: #{net_forward.1} parent=0 // pred_fallthru
    _
  // Predicated region
  $region18: #{net_forward.1} parent=0 // pred_check
    _
  $region19: #{net_forward.1} parent=0 // pred_check_branch
    %118 = sbr.rel (0) target = $region21
  $region20: #{net_forward.1} parent=0 // pred_region
    _
  $region21: #{net_forward.1} parent=0 // pred_fallthru
    _

</llo_original>
